<compile_context>
chip_gen: v7x
topology: tpu7x:2x2x1
jax: 0.10.0
libtpu: 0.0.40
codegen_flags: <defaults>
</compile_context>

<pallas_src>
import functools

import numpy as np
import jax
import jax.numpy as jnp
from jax.experimental import pallas as pl
from jax.experimental.pallas import tpu as pltpu


# ----------------------------------------------------------------------------------
# small helpers
# ----------------------------------------------------------------------------------
_ROW_TILE = 512                 # row tile for large-M matmul / LN kernels
_SQDIST_BUDGET = 8 * 1024 * 1024   # bytes for one (tn, M) f32 sqdist output block


def _zero_map(ndim):
    return lambda i: (0,) * ndim


def _mxu_matmul(a, b):
    """a @ b on the MXU.  bf16 weights are consumed as-is (a is cast to match);
    f32 x f32 contractions are cast to bf16 when the contraction is wide."""
    if b.dtype == jnp.bfloat16:
        a = a.astype(jnp.bfloat16)
    elif a.shape[-1] >= 16:
        a = a.astype(jnp.bfloat16)
        b = b.astype(jnp.bfloat16)
    return jnp.dot(a, b, preferred_element_type=jnp.float32)


def _mxu_dot_nt(a, b):
    """a (N,K) @ b(M,K)^T -> (N,M) on the MXU (bf16 inputs when K is wide)."""
    if a.shape[-1] >= 16:
        a = a.astype(jnp.bfloat16)
        b = b.astype(jnp.bfloat16)
    return jax.lax.dot_general(a, b, (((1,), (1,)), ((), ())),
                               preferred_element_type=jnp.float32)


def _gelu(x):
    # tanh-approximate GELU: tanh runs on the EUP (separate bundle slot), relieving
    # the VALU.  |diff| vs exact erf GELU < 1e-3.
    c = 0.7978845608028654  # sqrt(2/pi)
    return 0.5 * x * (1.0 + jnp.tanh(c * (x + 0.044715 * x * x * x)))


# ----------------------------------------------------------------------------------
# Pallas kernels: linear / LN / fused pos-embed MLP
# ----------------------------------------------------------------------------------
def _linear_kernel(x_ref, w_ref, b_ref, o_ref, *, act):
    y = _mxu_matmul(x_ref[...], w_ref[...]) + b_ref[...]
    if act == 'relu':
        y = jnp.maximum(y, 0.0)
    elif act == 'gelu':
        y = _gelu(y)
    o_ref[...] = y


def _mlp2_kernel(x_ref, w1_ref, b1_ref, w2_ref, b2_ref, o_ref):
    h = _mxu_matmul(x_ref[...], w1_ref[...]) + b1_ref[...]
    h = _gelu(h)
    o_ref[...] = _mxu_matmul(h, w2_ref[...]) + b2_ref[...]


def _ln_kernel(x_ref, g_ref, b_ref, o_ref):
    x = x_ref[...]
    mu = jnp.mean(x, axis=-1, keepdims=True)
    var = jnp.mean(jnp.square(x - mu), axis=-1, keepdims=True)
    o_ref[...] = (x - mu) * jax.lax.rsqrt(var + 1e-5) * g_ref[...] + b_ref[...]


def _choose_row_tile(M):
    if M > _ROW_TILE:
        return _ROW_TILE
    if M >= 64 and M % 16 == 0:
        return M // 2          # two exact row blocks -> both v7x TensorCores busy
    return M                   # single full-extent block (any M, no (8,128) issue)


def _row_call(kernel, x, consts, n_out):
    """Run `kernel(x_tile, *const_refs, o_tile)` over the rows of x (f32 output)."""
    M, K = x.shape
    tm = _choose_row_tile(M)
    Mp = pl.cdiv(M, tm) * tm
    xin = x if Mp == M else jnp.pad(x, ((0, Mp - M), (0, 0)))   # pad only when needed
    const_specs = [pl.BlockSpec(c.shape, _zero_map(c.ndim)) for c in consts]
    out = pl.pallas_call(
        kernel,
        out_shape=jax.ShapeDtypeStruct((Mp, n_out), jnp.float32),
        grid=(Mp // tm,),
        in_specs=[pl.BlockSpec((tm, K), lambda i: (i, 0))] + const_specs,
        out_specs=pl.BlockSpec((tm, n_out), lambda i: (i, 0)),
        compiler_params=pltpu.CompilerParams(dimension_semantics=("parallel",)),
    )(xin, *consts)
    return out if Mp == M else out[:M]


def pallas_linear(x, w, b, act='none'):
    """y = act(x @ w + b).  x:(M,K), w:(K,N) (f32 or bf16), b:(N,) -> (M,N) f32."""
    x = jnp.asarray(x, jnp.float32)
    w = jnp.asarray(w)
    b = jnp.asarray(b, jnp.float32).reshape(1, -1)
    kern = functools.partial(_linear_kernel, act=act)
    return _row_call(kern, x, [w, b], w.shape[1])


def pallas_mlp2(x, w1, b1, w2, b2):
    """Fused Linear -> GELU -> Linear (used by all pos-embeds)."""
    x = jnp.asarray(x, jnp.float32)
    consts = [jnp.asarray(w1), jnp.asarray(b1, jnp.float32).reshape(1, -1),
              jnp.asarray(w2), jnp.asarray(b2, jnp.float32).reshape(1, -1)]
    return _row_call(_mlp2_kernel, x, consts, consts[2].shape[1])


def pallas_layernorm(x, g, b):
    x = jnp.asarray(x, jnp.float32)
    D = x.shape[1]
    consts = [jnp.asarray(g, jnp.float32).reshape(1, D),
              jnp.asarray(b, jnp.float32).reshape(1, D)]
    return _row_call(_ln_kernel, x, consts, D)


# ----------------------------------------------------------------------------------
# Pallas kernel: fused transformer block (LN1 -> fused QKV -> per-head masked
# softmax attention -> single proj + residual -> LN2 -> MLP(GELU) + residual)
# ----------------------------------------------------------------------------------
def _block_kernel(*refs, num_heads, scale, use_mask):
    if use_mask:
        (x_ref, m_ref, n1g, n1b, wqkv, bqkv, wproj, bproj,
         n2g, n2b, w1, b1, w2, b2, o_ref) = refs
    else:
        (x_ref, n1g, n1b, wqkv, bqkv, wproj, bproj,
         n2g, n2b, w1, b1, w2, b2, o_ref) = refs
        m_ref = None
    H = num_heads
    x = x_ref[0]                                            # (N, D) f32
    N, D = x.shape
    Dh = D // H

    # ---- pre-norm attention ----
    mu = jnp.mean(x, axis=-1, keepdims=True)
    var = jnp.mean(jnp.square(x - mu), axis=-1, keepdims=True)
    h = (x - mu) * jax.lax.rsqrt(var + 1e-5) * n1g[...] + n1b[...]

    # one lane-dense (N, D) @ (D, 3D) matmul; heads are static lane slices of it.
    qkv = _mxu_matmul(h, wqkv[...]) + bqkv[...]             # (N, 3D) f32

    if use_mask:
        blocked = m_ref[0] != 0.0                           # nonzero == blocked
    neg = float(-jnp.finfo(jnp.float32).max)
    ctx_heads = []
    for hh in range(H):                                     # static unroll over heads
        q = qkv[:, hh * Dh:(hh + 1) * Dh]
        k = qkv[:, D + hh * Dh:D + (hh + 1) * Dh]
        v = qkv[:, 2 * D + hh * Dh:2 * D + (hh + 1) * Dh]
        s = _mxu_dot_nt(q * scale, k)                       # (N, N)
        if use_mask:
            s = jnp.where(blocked, neg, s)
        # NOTE: fully-masked (padded) rows yield a uniform softmax instead of NaN
        # (torch masked_fill(-inf) would NaN); those rows are discarded downstream.
        s = s - jnp.max(s, axis=-1, keepdims=True)
        e = jnp.exp(s)
        p = e * pl.reciprocal(jnp.sum(e, axis=-1, keepdims=True), approx=True)
        ctx_heads.append(_mxu_matmul(p, v))                 # (N, Dh)
    ctx = jnp.concatenate(ctx_heads, axis=-1)               # (N, D) — head order = torch
    x = x + _mxu_matmul(ctx, wproj[...]) + bproj[...]       # single wide projection

    # ---- pre-norm MLP ----
    mu2 = jnp.mean(x, axis=-1, keepdims=True)
    var2 = jnp.mean(jnp.square(x - mu2), axis=-1, keepdims=True)
    g = (x - mu2) * jax.lax.rsqrt(var2 + 1e-5) * n2g[...] + n2b[...]
    g = _mxu_matmul(g, w1[...]) + b1[...]
    g = _gelu(g)
    g = _mxu_matmul(g, w2[...]) + b2[...]
    o_ref[0] = x + g


def block_apply(bp, x, mask, num_heads):
    # TODO(synk): timm-style pre-norm Block / Attention / Mlp reconstructed from the
    # public Point-M2AE implementation (internals not in the provided source).
    # DropPath is identity (drop_path_rate = 0).
    x = jnp.asarray(x, jnp.float32)
    B, N, D = x.shape
    H = num_heads
    scale = (D // H) ** -0.5
    # weights already stored (at init) in the exact layout + dtype the kernel wants
    consts = [bp['n1_g'], bp['n1_b'],
              bp['qkv_w'], bp['qkv_b'],
              bp['proj_w'], bp['proj_b'],
              bp['n2_g'], bp['n2_b'],
              bp['fc1_w'], bp['fc1_b'],
              bp['fc2_w'], bp['fc2_b']]
    use_mask = mask is not None
    args = [x]
    in_specs = [pl.BlockSpec((1, N, D), lambda i: (i, 0, 0))]
    if use_mask:
        # TODO(synk): mask is still shipped as (B,N,N) f32; building it in-kernel from
        # masked_center + vis_len would cut HBM traffic but breaks the reference's
        # cached-xyz_dist quirk, so it stays host-built.
        args.append(jnp.asarray(mask, jnp.float32))
        in_specs.append(pl.BlockSpec((1, N, N), lambda i: (i, 0, 0)))
    for c in consts:
        args.append(c)
        in_specs.append(pl.BlockSpec(c.shape, _zero_map(c.ndim)))
    kern = functools.partial(_block_kernel, num_heads=H, scale=scale, use_mask=use_mask)
    return pl.pallas_call(
        kern,
        out_shape=jax.ShapeDtypeStruct((B, N, D), jnp.float32),
        grid=(B,),
        in_specs=in_specs,
        out_specs=pl.BlockSpec((1, N, D), lambda i: (i, 0, 0)),
        compiler_params=pltpu.CompilerParams(
            dimension_semantics=("parallel",),
            vmem_limit_bytes=48 * 1024 * 1024),
    )(*args)


# ----------------------------------------------------------------------------------
# Pallas kernels: pairwise squared distances & Chamfer-L2 (MXU formulation)
# ----------------------------------------------------------------------------------
def _sqdist_kernel(x_ref, y_ref, o_ref):
    x = x_ref[0]                                            # (tn, 3)
    y = y_ref[0]                                            # (M, 3)
    xx = jnp.sum(x * x, axis=-1, keepdims=True)             # (tn, 1)
    yy = jax.lax.dot_general(jnp.ones((1, 3), jnp.float32), y * y,
                             (((1,), (1,)), ((), ())),
                             preferred_element_type=jnp.float32)   # (1, M)
    xy = jax.lax.dot_general(x, y, (((1,), (1,)), ((), ())),
                             preferred_element_type=jnp.float32)   # (tn, M)
    o_ref[0] = xx + yy - 2.0 * xy


def _sqdist_row_tile(N, M):
    # VMEM-aware row tile: keep a (tn, M) f32 output block around _SQDIST_BUDGET so a
    # double-buffered pair stays well under even v7x's 64 MiB VMEM.
    tn = (_SQDIST_BUDGET // (4 * max(M, 1))) // 8 * 8
    tn = max(8, min(2048, tn))
    return N if N <= tn else tn


def pallas_sqdist(x, y):
    """Batched pairwise squared distances x:(B,N,3), y:(B,M,3) -> (B,N,M)."""
    x = jnp.asarray(x, jnp.float32)
    y = jnp.asarray(y, jnp.float32)
    B, N, _ = x.shape
    M = y.shape[1]
    tn = _sqdist_row_tile(N, M)
    Np = pl.cdiv(N, tn) * tn
    xin = x if Np == N else jnp.pad(x, ((0, 0), (0, Np - N), (0, 0)))
    out = pl.pallas_call(
        _sqdist_kernel,
        out_shape=jax.ShapeDtypeStruct((B, Np, M), jnp.float32),
        grid=(B, Np // tn),
        in_specs=[pl.BlockSpec((1, tn, 3), lambda i, j: (i, j, 0)),
                  pl.BlockSpec((1, M, 3), lambda i, j: (i, 0, 0))],
        out_specs=pl.BlockSpec((1, tn, M), lambda i, j: (i, j, 0)),
        compiler_params=pltpu.CompilerParams(
            dimension_semantics=("parallel", "parallel")),
    )(xin, y)
    return out if Np == N else out[:, :N]


def _chamfer_kernel(p_ref, q_ref, o1_ref, o2_ref):
    p = p_ref[0]                                            # (n1, 3)
    q = q_ref[0]                                            # (n2, 3)
    pp = jnp.sum(p * p, axis=-1, keepdims=True)
    qq = jax.lax.dot_general(jnp.ones((1, 3), jnp.float32), q * q,
                             (((1,), (1,)), ((), ())),
                             preferred_element_type=jnp.float32)
    pq = jax.lax.dot_general(p, q, (((1,), (1,)), ((), ())),
                             preferred_element_type=jnp.float32)
    d = jnp.maximum(pp + qq - 2.0 * pq, 0.0)
    o1_ref[0] = jnp.min(d, axis=1, keepdims=True)           # (n1, 1)
    o2_ref[0] = jnp.min(d, axis=0, keepdims=True)           # (1, n2)


def chamfer_l2(p, q):
    """ChamferDistanceL2: mean(min_j ||p-q||^2) + mean(min_i ||p-q||^2)."""
    p = jnp.asarray(p, jnp.float32)
    q = jnp.asarray(q, jnp.float32)
    L, n1, _ = p.shape
    n2 = q.shape[1]
    o1, o2 = pl.pallas_call(
        _chamfer_kernel,
        out_shape=(jax.ShapeDtypeStruct((L, n1, 1), jnp.float32),
                   jax.ShapeDtypeStruct((L, 1, n2), jnp.float32)),
        grid=(L,),
        in_specs=[pl.BlockSpec((1, n1, 3), lambda i: (i, 0, 0)),
                  pl.BlockSpec((1, n2, 3), lambda i: (i, 0, 0))],
        out_specs=(pl.BlockSpec((1, n1, 1), lambda i: (i, 0, 0)),
                   pl.BlockSpec((1, 1, n2), lambda i: (i, 0, 0))),
        compiler_params=pltpu.CompilerParams(dimension_semantics=("parallel",)),
    )(p, q)
    return jnp.mean(o1) + jnp.mean(o2)


# ----------------------------------------------------------------------------------
# Parameter init (deterministic, trunc-normal std=0.02 like the PyTorch module).
# Matmul weights with contraction >= 16 are stored bf16 ONCE, in kernel layout.
# ----------------------------------------------------------------------------------
_KEY = jax.random.PRNGKey(0)
_KCOUNT = [0]


def _next_key():
    _KCOUNT[0] += 1
    return jax.random.fold_in(_KEY, _KCOUNT[0])


def trunc_normal(shape, std=0.02):
    return (std * jax.random.truncated_normal(_next_key(), -2.0, 2.0, shape)).astype(jnp.float32)


def matmul_w(shape, std=0.02):
    w = trunc_normal(shape, std)
    return w.astype(jnp.bfloat16) if shape[0] >= 16 else w


def zeros(shape):
    return jnp.zeros(shape, jnp.float32)


def ones(shape):
    return jnp.ones(shape, jnp.float32)


def init_block_params(dim, mlp_ratio=4):
    return dict(
        n1_g=ones((1, dim)), n1_b=zeros((1, dim)),
        qkv_w=matmul_w((dim, 3 * dim)), qkv_b=zeros((1, 3 * dim)),
        proj_w=matmul_w((dim, dim)), proj_b=zeros((1, dim)),
        n2_g=ones((1, dim)), n2_b=zeros((1, dim)),
        fc1_w=matmul_w((dim, mlp_ratio * dim)), fc1_b=zeros((1, mlp_ratio * dim)),
        fc2_w=matmul_w((mlp_ratio * dim, dim)), fc2_b=zeros((1, dim)),
    )


def init_pos_embed(dim):
    return dict(w1=matmul_w((3, dim)), b1=zeros((dim,)),       # K=3 stays f32
                w2=matmul_w((dim, dim)), b2=zeros((dim,)))


def init_token_embed(in_c, out_c):
    # Token_Embed: Conv1d(in,128)-BN-ReLU-Conv1d(128,256) | max | cat |
    #              Conv1d(512,512)-BN-ReLU-Conv1d(512,out)| max
    return dict(
        w1=matmul_w((in_c, 128)), b1=zeros((128,)),
        bn1_g=ones((128,)), bn1_b=zeros((128,)),
        w2=matmul_w((128, 256)), b2=zeros((256,)),
        w3=matmul_w((512, 512)), b3=zeros((512,)),
        bn2_g=ones((512,)), bn2_b=zeros((512,)),
        w4=matmul_w((512, out_c)), b4=zeros((out_c,)),
    )


def init_params(cfg):
    enc_dims = cfg['encoder_dims']
    dec_dims = cfg['decoder_dims']
    p = dict()
    p['token_embed'] = [init_token_embed(3 if i == 0 else enc_dims[i - 1], d)
                        for i, d in enumerate(enc_dims)]
    p['enc_pos'] = [init_pos_embed(d) for d in enc_dims]
    p['enc_blocks'] = [[init_block_params(d) for _ in range(cfg['encoder_depths'][i])]
                       for i, d in enumerate(enc_dims)]
    p['enc_norms'] = [dict(g=ones((d,)), b=zeros((d,))) for d in enc_dims]
    p['mask_token'] = trunc_normal((1, dec_dims[0]))
    p['dec_pos'] = [init_pos_embed(d) for d in dec_dims]
    p['dec_blocks'] = [[init_block_params(d) for _ in range(cfg['decoder_depths'][i])]
                       for i, d in enumerate(dec_dims)]
    p['token_prop'] = []
    for i in range(1, len(dec_dims)):
        in_c = dec_dims[i] + dec_dims[i - 1]
        out_c = dec_dims[i]
        blocks = [dict(w1=matmul_w((out_c, out_c)), b1=zeros((out_c,)),
                       bn1_g=ones((out_c,)), bn1_b=zeros((out_c,)),
                       w2=matmul_w((out_c, out_c)), b2=zeros((out_c,)),
                       bn2_g=ones((out_c,)), bn2_b=zeros((out_c,)))
                  for _ in range(cfg['decoder_up_blocks'][i - 1])]
        p['token_prop'].append(dict(
            fuse_w=matmul_w((in_c, out_c)), fuse_b=zeros((out_c,)),
            fuse_bn_g=ones((out_c,)), fuse_bn_b=zeros((out_c,)),
            blocks=blocks))
    p['dec_norm'] = dict(g=ones((dec_dims[-1],)), b=zeros((dec_dims[-1],)))
    p['rec_w'] = matmul_w((dec_dims[-1], 3 * cfg['group_sizes'][0]))
    p['rec_b'] = zeros((3 * cfg['group_sizes'][0],))
    # TODO(synk): eval-only `self.propagations` (PointNetFeaturePropagation_) are never
    # used in the training forward and are omitted.
    return p


# ----------------------------------------------------------------------------------
# Module applications (Pallas for matmuls / LN / attention; glue in JAX/numpy)
# ----------------------------------------------------------------------------------
def batchnorm_train(x, g, b, eps=1e-5):
    # BatchNorm1d in training mode: per-channel batch statistics (biased variance).
    mu = jnp.mean(x, axis=0, keepdims=True)
    var = jnp.mean(jnp.square(x - mu), axis=0, keepdims=True)
    return (x - mu) * jax.lax.rsqrt(var + eps) * g + b


def token_embed_apply(p, pg):
    # pg: (B, G, n, c) channel-last (PyTorch works on (BG, c, n); same math).
    B, G, n, c = pg.shape
    x = pg.reshape(B * G * n, c)
    f = pallas_linear(x, p['w1'], p['b1'])
    f = jax.nn.relu(batchnorm_train(f, p['bn1_g'], p['bn1_b']))
    f = pallas_linear(f, p['w2'], p['b2'])                       # (BGn, 256)
    f = f.reshape(B * G, n, 256)
    fg = jnp.max(f, axis=1, keepdims=True)                       # global feature
    f = jnp.concatenate([jnp.broadcast_to(fg, (B * G, n, 256)), f], axis=-1)
    f = f.reshape(B * G * n, 512)
    f = pallas_linear(f, p['w3'], p['b3'])
    f = jax.nn.relu(batchnorm_train(f, p['bn2_g'], p['bn2_b']))
    f = pallas_linear(f, p['w4'], p['b4'])
    out_c = f.shape[-1]
    f = f.reshape(B * G, n, out_c)
    return jnp.max(f, axis=1).reshape(B, G, out_c)


def pos_embed_apply(p, xyz):
    # Linear(3,D) - GELU - Linear(D,D), fused into one Pallas kernel.
    return pallas_mlp2(xyz.reshape(-1, 3), p['w1'], p['b1'], p['w2'], p['b2'])


def feature_prop_apply(p, xyz1, xyz2, points1, points2):
    # TODO(synk): PointNetFeaturePropagation (PointMLP flavour) internals are not in the
    # provided source; reconstructed as 3-NN inverse-squared-distance interpolation +
    # fuse ConvBNReLU1D + residual ConvBNReLURes1D blocks (all 1x1 convs in Pallas).
    xyz1 = np.asarray(xyz1, np.float32)
    xyz2 = np.asarray(xyz2, np.float32)
    points1 = np.asarray(points1, np.float32)
    points2 = np.asarray(points2, np.float32)
    B, N, _ = xyz1.shape
    d = np.asarray(pallas_sqdist(xyz1, xyz2))                    # (B, N, S)  Pallas
    order = np.argsort(d, axis=-1, kind='stable')[:, :, :3]
    dsel = np.take_along_axis(d, order, axis=-1)
    w = 1.0 / (np.maximum(dsel, 0.0) + 1e-8)
    w = w / np.sum(w, axis=-1, keepdims=True)
    nb = points2[np.arange(B)[:, None, None], order]             # (B, N, 3, C2)
    interp = np.sum(nb * w[..., None], axis=2)                   # (B, N, C2)
    newp = np.concatenate([points1, interp], axis=-1)
    x = jnp.asarray(newp.reshape(B * N, -1))
    x = jax.nn.relu(batchnorm_train(pallas_linear(x, p['fuse_w'], p['fuse_b']),
                                    p['fuse_bn_g'], p['fuse_bn_b']))
    for blk in p['blocks']:
        y = jax.nn.relu(batchnorm_train(pallas_linear(x, blk['w1'], blk['b1']),
                                        blk['bn1_g'], blk['bn1_b']))
        y = batchnorm_train(pallas_linear(y, blk['w2'], blk['b2']),
                            blk['bn2_g'], blk['bn2_b'])
        x = jax.nn.relu(x + y)
    return x.reshape(B, N, -1)


# ----------------------------------------------------------------------------------
# Grouping (FPS + KNN), H_Encoder, Point_M2AE forward
# ----------------------------------------------------------------------------------
def fps_np(xyz, n_samples):
    B, N, _ = xyz.shape
    idx = np.zeros((B, n_samples), dtype=np.int64)
    dist = np.full((B, N), 1e10, dtype=np.float64)
    farthest = np.zeros(B, dtype=np.int64)
    for i in range(n_samples):
        idx[:, i] = farthest
        centroid = xyz[np.arange(B), farthest][:, None, :]
        d = np.sum((xyz - centroid) ** 2, axis=-1)
        dist = np.minimum(dist, d)
        farthest = np.argmax(dist, axis=-1)
    return idx


def group_divider(xyz, num_group, group_size):
    # TODO(synk): exact CUDA FPS/KNN tie-breaking may differ; deterministic FPS from idx 0.
    xyz = np.asarray(xyz, np.float32)
    B, N, _ = xyz.shape
    cidx = fps_np(xyz, num_group)
    center = xyz[np.arange(B)[:, None], cidx]                    # (B, G, 3)
    d = np.asarray(pallas_sqdist(center, xyz))                   # (B, G, N)  Pallas
    knn = np.argsort(d, axis=-1, kind='stable')[:, :, :group_size]
    idx_flat = (knn + (np.arange(B) * N).reshape(B, 1, 1)).reshape(-1).astype(np.int64)
    nb = xyz.reshape(B * N, 3)[idx_flat].reshape(B, num_group, group_size, 3)
    nb = nb - center[:, :, None, :]
    return nb, center, idx_flat


def h_encoder_forward(p, neighborhoods, centers, idxs, cfg):
    num_heads = cfg['num_heads']
    L = len(centers)
    B, G_last, _ = centers[-1].shape

    # rand_mask on the coarsest level (np.random, as in the reference).
    num_mask = int(cfg['mask_ratio'] * G_last)
    overall = np.zeros((B, G_last))
    for i in range(B):
        m = np.hstack([np.zeros(G_last - num_mask), np.ones(num_mask)])
        np.random.shuffle(m)
        overall[i, :] = m
    bool_masked_pos = [overall.astype(bool)]

    # propagate visibility to finer levels via the grouping index maps (scatter of 0s).
    for i in range(L - 1, 0, -1):
        b, g, k, _ = neighborhoods[i].shape
        idx = np.asarray(idxs[i]).reshape(b * g, -1)
        vis = (~bool_masked_pos[-1].reshape(-1)).astype(np.int64)[:, None]
        idx_masked = (vis * idx).reshape(-1)
        masked_pos = np.ones(b * centers[i - 1].shape[1])
        masked_pos[idx_masked] = 0.0
        bool_masked_pos.append(masked_pos.astype(bool).reshape(b, centers[i - 1].shape[1]))
    bool_masked_pos.reverse()

    x_vis_list, mask_vis_list = [], []
    xyz_dist = None
    x_vis = None
    for i in range(L):
        if i == 0:
            git = token_embed_apply(p['token_embed'][0], jnp.asarray(neighborhoods[0]))
        else:
            b, g1, _ = x_vis.shape
            b, g2, k2, _ = neighborhoods[i].shape
            gathered = x_vis.reshape(b * g1, -1)[jnp.asarray(idxs[i])].reshape(b, g2, k2, -1)
            git = token_embed_apply(p['token_embed'][i], gathered)

        bool_vis_pos = ~bool_masked_pos[i]
        batch_size, seq_len, C = git.shape
        vis_len = bool_vis_pos.astype(np.int64).sum(axis=1)
        max_len = int(vis_len.max())

        git_np = np.array(git)
        cen_np = np.asarray(centers[i])
        x_vis_np = np.zeros((batch_size, max_len, C), np.float32)
        masked_center = np.zeros((batch_size, max_len, 3), np.float32)
        mask_vis = np.ones((batch_size, max_len, max_len), np.float32)
        for bz in range(batch_size):
            n = int(vis_len[bz])
            x_vis_np[bz, :n] = git_np[bz][bool_vis_pos[bz]]
            masked_center[bz, :n] = cen_np[bz][bool_vis_pos[bz]]
            mask_vis[bz, :n, :n] = 0.0

        if cfg['local_radius'][i] > 0:
            if xyz_dist is None or xyz_dist.shape[1] != max_len:
                sq = np.asarray(pallas_sqdist(masked_center, masked_center))
                xyz_dist = np.sqrt(np.maximum(sq, 0.0))
            mask_radius = (xyz_dist >= cfg['local_radius'][i]).astype(np.float32)
            mask_vis_att = mask_radius * mask_vis       # as in the reference (quirky product)
        else:
            mask_vis_att = mask_vis

        pos = pos_embed_apply(p['enc_pos'][i], jnp.asarray(masked_center))
        pos = pos.reshape(batch_size, max_len, C)
        xv = jnp.asarray(x_vis_np)
        for bp in p['enc_blocks'][i]:                   # Encoder_Block: x = block(x + pos, mask)
            xv = block_apply(bp, xv + pos, jnp.asarray(mask_vis_att), num_heads)
        x_vis_list.append(xv)
        vis_rows = ~(mask_vis[:, :, 0].astype(bool))
        mask_vis_list.append(vis_rows)

        if i != L - 1:
            git_np[bool_vis_pos] = np.asarray(xv)[vis_rows]
            x_vis = jnp.asarray(git_np)

    for i in range(L):
        xv = x_vis_list[i]
        Bx, Nx, Dx = xv.shape
        nrm = p['enc_norms'][i]
        x_vis_list[i] = pallas_layernorm(xv.reshape(-1, Dx), nrm['g'], nrm['b']).reshape(Bx, Nx, Dx)
    return x_vis_list, mask_vis_list, bool_masked_pos


def point_m2ae_forward(p, pts, cfg):
    pts_np = np.asarray(pts, np.float32)
    neighborhoods, centers, idxs = [], [], []
    for i in range(len(cfg['group_sizes'])):
        src = pts_np if i == 0 else centers[-1]
        nb, cen, idx = group_divider(src, cfg['num_groups'][i], cfg['group_sizes'][i])
        neighborhoods.append(nb)
        centers.append(cen)
        idxs.append(idx)

    x_vis_list, mask_vis_list, masks = h_encoder_forward(p, neighborhoods, centers, idxs, cfg)

    centers = centers[::-1]
    neighborhoods = neighborhoods[::-1]
    x_vis_list = x_vis_list[::-1]
    masks = masks[::-1]

    center_0 = None
    x_full = None
    pos_full = None
    for i in range(len(cfg['decoder_dims'])):
        center = centers[i]
        if i == 0:
            x_full = x_vis_list[0]
            mask = masks[0]
            B, _, C = x_full.shape
            vis_c = center[~mask].reshape(B, -1, 3)
            msk_c = center[mask].reshape(B, -1, 3)
            center_0 = np.concatenate([vis_c, msk_c], axis=1)
            pos_vis = pos_embed_apply(p['dec_pos'][0], jnp.asarray(vis_c)).reshape(B, -1, C)
            pos_msk = pos_embed_apply(p['dec_pos'][0], jnp.asarray(msk_c)).reshape(B, -1, C)
            pos_full = jnp.concatenate([pos_vis, pos_msk], axis=1)
            n_mask = pos_msk.shape[1]
            mask_tok = jnp.broadcast_to(p['mask_token'], (B, n_mask, C))
            x_full = jnp.concatenate([x_full, mask_tok], axis=1)
        else:
            x_vis = x_vis_list[i]
            bool_vis_pos = ~masks[i]
            mask_vis = mask_vis_list[i]           # NOTE: not reversed, as in the reference
            B, N, _ = center.shape
            C = x_vis.shape[-1]
            x_full_en = np.zeros((B, N, C), np.float32)
            x_full_en[bool_vis_pos] = np.asarray(x_vis)[mask_vis]
            xyz2 = center_0 if i == 1 else centers[i - 1]
            x_full = feature_prop_apply(p['token_prop'][i - 1], center, xyz2,
                                        x_full_en, np.asarray(x_full))
            pos_full = pos_embed_apply(p['dec_pos'][i], jnp.asarray(center)).reshape(B, N, -1)
        for bp in p['dec_blocks'][i]:             # Decoder_Block: x = block(x + pos)
            x_full = block_apply(bp, x_full + pos_full, None, cfg['num_heads'])

    B, N, C = x_full.shape
    nrm = p['dec_norm']
    x_full = pallas_layernorm(x_full.reshape(-1, C), nrm['g'], nrm['b']).reshape(B, N, C)

    m = masks[-2]
    x_rec = np.asarray(x_full)[m].reshape(-1, C)
    Lm = x_rec.shape[0]
    rec_points = pallas_linear(jnp.asarray(x_rec), p['rec_w'], p['rec_b']).reshape(Lm, -1, 3)
    gt_points = np.asarray(neighborhoods[-2])[m].reshape(Lm, -1, 3)
    loss = chamfer_l2(rec_points, jnp.asarray(gt_points))
    return loss


# ----------------------------------------------------------------------------------
if __name__ == "__main__":
    np.random.seed(0)
    cfg = dict(
        mask_ratio=0.75,
        encoder_depths=[1, 1, 1],
        encoder_dims=[32, 64, 128],
        local_radius=[0.32, 0.64, 1.28],
        num_heads=4,
        group_sizes=[8, 8, 4],
        num_groups=[32, 16, 8],
        decoder_depths=[1, 1],
        decoder_dims=[128, 64],
        decoder_up_blocks=[1],
        drop_path_rate=0.0,
    )
    params = init_params(cfg)
    pts = jax.random.uniform(jax.random.PRNGKey(0), (2, 64, 3),
                             minval=-1.0, maxval=1.0, dtype=jnp.float32)
    loss = point_m2ae_forward(params, pts, cfg)
    loss = jax.block_until_ready(loss)
    assert np.isfinite(float(loss))
    print("KERNEL_OK")
</pallas_src>

<mosaic_0001>
module attributes {stable_mosaic.version = 11 : i64} {
  func.func @_sqdist_kernel(%arg0: i32, %arg1: i32, %arg2: memref<1x32x3xf32, #tpu.memory_space<vmem>>, %arg3: memref<1x64x3xf32, #tpu.memory_space<vmem>>, %arg4: memref<1x32x64xf32, #tpu.memory_space<vmem>>) attributes {dimension_semantics = [#tpu.dimension_semantics<parallel>, #tpu.dimension_semantics<parallel>], iteration_bounds = array<i64: 2, 1>, scalar_prefetch = 0 : i64, scratch_operands = 0 : i64, tpu.core_type = #tpu.core_type<tc>, window_params = [{transform_indices = @transform_0, window_bounds = array<i64: 1, 32, 3>}, {transform_indices = @transform_1, window_bounds = array<i64: 1, 64, 3>}, {transform_indices = @transform_2, window_bounds = array<i64: 1, 32, 64>}]} {
    %c0 = arith.constant 0 : index
    %c0_0 = arith.constant 0 : index
    %c0_1 = arith.constant 0 : index
    %0 = vector.load %arg2[%c0, %c0_0, %c0_1] : memref<1x32x3xf32, #tpu.memory_space<vmem>>, vector<1x32x3xf32>
    %1 = vector.shape_cast %0 : vector<1x32x3xf32> to vector<32x3xf32>
    %c0_2 = arith.constant 0 : index
    %c0_3 = arith.constant 0 : index
    %c0_4 = arith.constant 0 : index
    %2 = vector.load %arg3[%c0_2, %c0_3, %c0_4] : memref<1x64x3xf32, #tpu.memory_space<vmem>>, vector<1x64x3xf32>
    %3 = vector.shape_cast %2 : vector<1x64x3xf32> to vector<64x3xf32>
    %4 = arith.mulf %1, %1 : vector<32x3xf32>
    %cst = arith.constant dense<0.000000e+00> : vector<32xf32>
    %5 = vector.multi_reduction <add>, %4, %cst [1] : vector<32x3xf32> to vector<32xf32>
    %6 = vector.shape_cast %5 : vector<32xf32> to vector<32x1xf32>
    %cst_5 = arith.constant 1.000000e+00 : f32
    %7 = vector.broadcast %cst_5 : f32 to vector<1x3xf32>
    %8 = arith.mulf %3, %3 : vector<64x3xf32>
    %cst_6 = arith.constant dense<0.000000e+00> : vector<1x64xf32>
    %9 = tpu.matmul %7, %8, %cst_6 {dimension_numbers = #tpu.dot_dimension_numbers<[1], [1], [0], [0], [0, 0, 1, 0], [], []>} : vector<1x3xf32>, vector<64x3xf32>, vector<1x64xf32> -> vector<1x64xf32>
    %cst_7 = arith.constant dense<0.000000e+00> : vector<32x64xf32>
    %10 = tpu.matmul %1, %3, %cst_7 {dimension_numbers = #tpu.dot_dimension_numbers<[1], [1], [0], [0], [0, 0, 1, 0], [], []>} : vector<32x3xf32>, vector<64x3xf32>, vector<32x64xf32> -> vector<32x64xf32>
    %11 = vector.broadcast %6 : vector<32x1xf32> to vector<32x64xf32>
    %12 = vector.broadcast %9 : vector<1x64xf32> to vector<32x64xf32>
    %13 = arith.addf %11, %12 : vector<32x64xf32>
    %cst_8 = arith.constant 2.000000e+00 : f32
    %14 = vector.broadcast %cst_8 : f32 to vector<32x64xf32>
    %15 = arith.mulf %14, %10 : vector<32x64xf32>
    %16 = arith.subf %13, %15 : vector<32x64xf32>
    %c0_9 = arith.constant 0 : index
    %c0_10 = arith.constant 0 : index
    %c0_11 = arith.constant 0 : index
    %17 = vector.load %arg4[%c0_9, %c0_10, %c0_11] : memref<1x32x64xf32, #tpu.memory_space<vmem>>, vector<1x32x64xf32>
    %18 = vector.shape_cast %17 : vector<1x32x64xf32> to vector<32x64xf32>
    %19 = vector.shape_cast %16 : vector<32x64xf32> to vector<1x32x64xf32>
    tpu.vector_store %arg4[%c0_9, %c0_10, %c0_11], %19 {strides = array<i32>} : memref<1x32x64xf32, #tpu.memory_space<vmem>>, vector<1x32x64xf32>,
    return
  }
  func.func @transform_0(%arg0: i32, %arg1: i32) -> (i32, i32, i32) {
    %c0_i32 = arith.constant 0 : i32
    %c0_i32_0 = arith.constant 0 : i32
    return %arg0, %arg1, %c0_i32 : i32, i32, i32
  }
  func.func @transform_1(%arg0: i32, %arg1: i32) -> (i32, i32, i32) {
    %c0_i32 = arith.constant 0 : i32
    %c0_i32_0 = arith.constant 0 : i32
    %c0_i32_1 = arith.constant 0 : i32
    return %arg0, %c0_i32, %c0_i32_0 : i32, i32, i32
  }
  func.func @transform_2(%arg0: i32, %arg1: i32) -> (i32, i32, i32) {
    %c0_i32 = arith.constant 0 : i32
    %c0_i32_0 = arith.constant 0 : i32
    return %arg0, %arg1, %c0_i32 : i32, i32, i32
  }
}

</mosaic_0001>

<llo_original>
// kernel: tpu_custom_call.1
$region0: #{tpu_custom_call.1}
  #allocation0 [shape = 'u32[]', space=smem, size = 0x4, offset = 0x4, fixed_abs, tag = 'smem constant byte address 0x4 - core index']
  #allocation1 [shape = 'u32[144,128]{1,0:T(1,128)}', space=vmem, size = 0x12000, scoped, tag = 'internal scratch']
  %s0 = inlined_call_operand.vmem [shape: f32[2,32,3], index: 0, kind: input, shape index: {}]
  %s1 = inlined_call_operand.vmem [shape: f32[2,64,3], index: 1, kind: input, shape index: {}]
  %s2 = inlined_call_operand.hbm [shape: f32[2,32,64], index: 2, kind: output, shape index: {}]
  %s3 = sld [smem:[#allocation0]]
  $region41: #{tpu_custom_call.1} parent=0
    _
  %s5 = ssub.s32 1, %s3
  %s6 = scalar_select 0, %s5, %s3
  $region1: #{tpu_custom_call.1} parent=0
    #allocation2 [shape = 'u8[32768]{0}', space=vmem, size = 0x8000, scoped, tag = 'output window, operand 0']
    #allocation3 [shape = 's32[2]{0}', space=sflag, size = 0x8, scoped, tag = 'scoped memory for tpu_custom_call.1']
    %7 = vsyncpa [#allocation3], 0
    %s8 = scalar_lea.sflag [#allocation3], 1
    %9 = vsyncpa %s8, 0
    loop: start=0, step=1, limit=4
    $region2: #{tpu_custom_call.1} parent=1 // loop_pre_header
      _
    $region3: #{tpu_custom_call.1} parent=1 // loop_header
      %s11 = sphi 0, %s15
      %p12 = scmp.ge.s32.totalorder %s11, 4
      %s18 = sphi 0, %s30
      %s19 = sphi 0, %s26
      %s20 = sphi 0, %s18
      %s21 = sphi 0, %s19
      %s22 = sphi 0, %s20
      %s23 = sphi 0, %s21
      %s35 = sphi 0, %s37
      %s38 = sphi 0, %s35
      %s39 = sphi 0, %s38
      %s55 = sphi 0, %s39
      %s61 = sphi 0, %s63
      %s64 = sphi 0, %s61
      %s65 = sphi 0, %s64
      %s81 = sphi 0, %s65
      %s89 = sphi 0, %s91
      %s92 = sphi 0, %s89
      %s93 = sphi 0, %s92
      %s109 = sphi 0, %s93
    $region4: #{tpu_custom_call.1} parent=1 // loop_header_branch
      %14 = sbr.rel (%p12) target = $region8
    $region5: #{tpu_custom_call.1} parent=1 // loop_body
      %s16 = ssub.s32 %s11, 1
      %s17 = ssub.s32 %s11, 2
      %s24 = sadd.s32 1, %s19
      %p25 = scmp.ge.s32.totalorder %s24, 1
      %s26 = scalar_select %p25, 0, %s24
      %s27 = sadd.s32 1, %s18
      %s28 = scalar_select %p25, %s27, %s18
      %p29 = scmp.ge.s32.totalorder %s28, 2
      %s30 = scalar_select %p29, 0, %s28
      %s31 = ssub.s32 %s18, %s30
      %s32 = ssub.s32 %s19, %s26
      %s33 = sor.u32 %s31, %s32
      %p34 = scmp.eq.s32.totalorder %s33, 0
      %s36 = sadd.s32 %s35, 1
      %s37 = scalar_select %p34, %s35, %s36
      %p40 = pneg %p34
      %p41 = scmp.eq.s32.totalorder %s11, 1
      %p42 = por %p40, %p41
      %p43 = scmp.ne.s32.totalorder %s35, %s38
      %p44 = scmp.eq.s32.totalorder %s11, 0
      %p45 = por %p43, %p44
      %p46 = scmp.ne.s32.totalorder %s35, %s38
      %p47 = scmp.eq.s32.totalorder %s16, 1
      %p48 = por %p46, %p47
      %p49 = scmp.ne.s32.totalorder %s38, %s39
      %p50 = scmp.eq.s32.totalorder %s16, 0
      %p51 = por %p49, %p50
      %p52 = scmp.ne.s32.totalorder %s38, %s39
      %p53 = scmp.eq.s32.totalorder %s17, 1
      %p54 = por %p52, %p53
      %p56 = scmp.ne.s32.totalorder %s39, %s55
      %p57 = scmp.eq.s32.totalorder %s17, 0
      %p58 = por %p56, %p57
      %s59 = ssub.s32 %s18, %s30
      %p60 = scmp.eq.s32.totalorder %s59, 0
      %s62 = sadd.s32 %s61, 1
      %s63 = scalar_select %p60, %s61, %s62
      %p66 = pneg %p60
      %p67 = scmp.eq.s32.totalorder %s11, 1
      %p68 = por %p66, %p67
      %p69 = scmp.ne.s32.totalorder %s61, %s64
      %p70 = scmp.eq.s32.totalorder %s11, 0
      %p71 = por %p69, %p70
      %p72 = scmp.ne.s32.totalorder %s61, %s64
      %p73 = scmp.eq.s32.totalorder %s16, 1
      %p74 = por %p72, %p73
      %p75 = scmp.ne.s32.totalorder %s64, %s65
      %p76 = scmp.eq.s32.totalorder %s16, 0
      %p77 = por %p75, %p76
      %p78 = scmp.ne.s32.totalorder %s64, %s65
      %p79 = scmp.eq.s32.totalorder %s17, 1
      %p80 = por %p78, %p79
      %p82 = scmp.ne.s32.totalorder %s65, %s81
      %p83 = scmp.eq.s32.totalorder %s17, 0
      %p84 = por %p82, %p83
      %s85 = ssub.s32 %s18, %s30
      %s86 = ssub.s32 %s19, %s26
      %s87 = sor.u32 %s85, %s86
      %p88 = scmp.eq.s32.totalorder %s87, 0
      %s90 = sadd.s32 %s89, 1
      %s91 = scalar_select %p88, %s89, %s90
      %p94 = pneg %p88
      %p95 = scmp.eq.s32.totalorder %s11, 1
      %p96 = por %p94, %p95
      %p97 = scmp.ne.s32.totalorder %s89, %s92
      %p98 = scmp.eq.s32.totalorder %s11, 0
      %p99 = por %p97, %p98
      %p100 = scmp.ne.s32.totalorder %s89, %s92
      %p101 = scmp.eq.s32.totalorder %s16, 1
      %p102 = por %p100, %p101
      %p103 = scmp.ne.s32.totalorder %s92, %s93
      %p104 = scmp.eq.s32.totalorder %s16, 0
      %p105 = por %p103, %p104
      %p106 = scmp.ne.s32.totalorder %s92, %s93
      %p107 = scmp.eq.s32.totalorder %s17, 1
      %p108 = por %p106, %p107
      %p110 = scmp.ne.s32.totalorder %s93, %s109
      %p111 = scmp.eq.s32.totalorder %s17, 0
      %p112 = por %p110, %p111
      %p113 = scmp.le.s32.totalorder 1, %s11
      %p114 = scmp.lt.s32.totalorder %s11, 3
      %p115 = pnand %p113, %p114
      %p116 = pneg %p115
      // Predicated region
      $region9: #{tpu_custom_call.1} parent=5 // pred_check
        _
      $region10: #{tpu_custom_call.1} parent=5 // pred_check_branch
        %118 = sbr.rel (%p115) target = $region12
      $region11: #{tpu_custom_call.1} parent=5 // pred_region
        %s119 = ssub.s32 %s11, 1
      $region12: #{tpu_custom_call.1} parent=5 // pred_fallthru
        _
      %p120 = scmp.lt.s32.totalorder %s11, 2
      // Predicated region
      $region13: #{tpu_custom_call.1} parent=5 // pred_check
        %p121 = pneg %p120
      $region14: #{tpu_custom_call.1} parent=5 // pred_check_branch
        %123 = sbr.rel (%p121) target = $region16
      $region15: #{tpu_custom_call.1} parent=5 // pred_region
        // Predicated region
        $region17: #{tpu_custom_call.1} parent=15 // pred_check
          %p124 = pneg %p45
        $region18: #{tpu_custom_call.1} parent=15 // pred_check_branch
          %126 = sbr.rel (%p124) target = $region20
        $region19: #{tpu_custom_call.1} parent=15 // pred_region
          %s127 = smul.u32 4, %s19
          %p128 = scmp.lt.s32.totalorder %s18, 1
          %s129 = scalar_select %p128, %s18, 1
          %p130 = scmp.lt.s32.totalorder %s127, 3
          %s131 = scalar_select %p130, %s127, 3
          %s132 = smul.addr %s129, 4
          %s133 = sadd.s32 %s131, %s132
          %s134 = smul.addr %s133, 8
          %s135 = scalar_lea.vmem %s0, %s134
          %s136 = smul.u32 4, %s19
        $region20: #{tpu_custom_call.1} parent=15 // pred_fallthru
          _
        // Predicated region
        $region21: #{tpu_custom_call.1} parent=15 // pred_check
          %p137 = pneg %p71
        $region22: #{tpu_custom_call.1} parent=15 // pred_check_branch
          %139 = sbr.rel (%p137) target = $region24
        $region23: #{tpu_custom_call.1} parent=15 // pred_region
          %p140 = scmp.lt.s32.totalorder %s18, 1
          %s141 = scalar_select %p140, %s18, 1
          %s142 = smul.addr %s141, 8
          %s143 = smul.addr %s142, 8
          %s144 = scalar_lea.vmem %s1, %s143
        $region24: #{tpu_custom_call.1} parent=15 // pred_fallthru
          _
      $region16: #{tpu_custom_call.1} parent=5 // pred_fallthru
        _
      %p145 = scmp.le.s32.totalorder 1, %s11
      %p146 = scmp.lt.s32.totalorder %s11, 3
      %p147 = pnand %p145, %p146
      %p148 = pneg %p147
      // Predicated region
      $region25: #{tpu_custom_call.1} parent=5 // pred_check
        _
      $region26: #{tpu_custom_call.1} parent=5 // pred_check_branch
        %150 = sbr.rel (%p147) target = $region28
      $region27: #{tpu_custom_call.1} parent=5 // pred_region
        %s151 = ssub.s32 %s11, 1
        %s152 = smul.u32 4, %s21
        %p153 = scmp.lt.s32.totalorder %s20, 1
        %s154 = scalar_select %p153, %s20, 1
        %p155 = scmp.lt.s32.totalorder %s152, 3
        %s156 = scalar_select %p155, %s152, 3
        %s157 = smul.addr %s154, 4
        %s158 = sadd.s32 %s156, %s157
        %s159 = smul.addr %s158, 8
        %s160 = scalar_lea.vmem %s0, %s159
        %p161 = pneg %p51
        %p162 = pneg %p48
        %p163 = scmp.lt.s32.totalorder %s20, 1
        %s164 = scalar_select %p163, %s20, 1
        %s165 = smul.addr %s164, 8
        %s166 = smul.addr %s165, 8
        %s167 = scalar_lea.vmem %s1, %s166
        %p168 = pneg %p77
        %p169 = pneg %p74
        %p170 = pneg %p105
        %p171 = pneg %p102
        %s172 = sand.u32 %s92, 1
        %s173 = scalar_lea.sflag [#allocation3], %s172
        %s174 = sand.u32 %s92, 1
        %s175 = smul.addr %s174, 32
        %s176 = scalar_lea.vmem [#allocation2], %s175
        %s177 = smul.u32 4, %s21
        %p178 = scmp.lt.s32.totalorder %s20, 1
        %s179 = scalar_select %p178, %s20, 1
        %p180 = scmp.lt.s32.totalorder %s177, 3
        %s181 = scalar_select %p180, %s177, 3
        %s182 = smul.addr %s179, 4
        %s183 = sadd.s32 %s181, %s182
        %s184 = smul.addr %s183, 8
        %s185 = scalar_lea.vmem %s0, %s184
        %s186 = smul.u32 4, %s21
        %p187 = scmp.lt.s32.totalorder %s20, 1
        %s188 = scalar_select %p187, %s20, 1
        %s189 = smul.addr %s188, 8
        %s190 = smul.addr %s189, 8
        %s191 = scalar_lea.vmem %s1, %s190
        %s192 = smul.u32 4, %s21
        %v193 = vld [vmem:[%s185] sm:$0xff]
        %v194 = vld [vmem:[%s185 + $0x8] sm:$0xff]
        %v195 = vld [vmem:[%s185 + $0x10] sm:$0xff]
        %v196 = vld [vmem:[%s185 + $0x18] sm:$0xff]
        %v197 = vld [vmem:[%s191] sm:$0xff]
        %v198 = vld [vmem:[%s191 + $0x8] sm:$0xff]
        %v199 = vld [vmem:[%s191 + $0x10] sm:$0xff]
        %v200 = vld [vmem:[%s191 + $0x18] sm:$0xff]
        %v201 = vld [vmem:[%s191 + $0x20] sm:$0xff]
        %v202 = vld [vmem:[%s191 + $0x28] sm:$0xff]
        %v203 = vld [vmem:[%s191 + $0x30] sm:$0xff]
        %v204 = vld [vmem:[%s191 + $0x38] sm:$0xff]
        %v205 = vmul.f32 %v193, %v193
        %v206 = vmul.f32 %v194, %v194
        %v207 = vmul.f32 %v195, %v195
        %v208 = vmul.f32 %v196, %v196
        %vm209 = vcmask 23552
        %v210 = vsel %vm209, %v205, 0.0
        %211 = vadd.xlane.f32.xlu0 %v210
        %v212 = vpop.xlane.xlu0 %211
        %v213 = vsel %vm209, %v206, 0.0
        %214 = vadd.xlane.f32.xlu0 %v213
        %v215 = vpop.xlane.xlu0 %214
        %v216 = vsel %vm209, %v207, 0.0
        %217 = vadd.xlane.f32.xlu0 %v216
        %v218 = vpop.xlane.xlu0 %217
        %v219 = vsel %vm209, %v208, 0.0
        %220 = vadd.xlane.f32.xlu0 %v219
        %v221 = vpop.xlane.xlu0 %220
        %v222 = vmul.f32 %v197, %v197
        %v223 = vmul.f32 %v198, %v198
        %v224 = vmul.f32 %v199, %v199
        %v225 = vmul.f32 %v200, %v200
        %v226 = vmul.f32 %v201, %v201
        %v227 = vmul.f32 %v202, %v202
        %v228 = vmul.f32 %v203, %v203
        %v229 = vmul.f32 %v204, %v204
        %v231 = vsel %vm209, 1.0, 0
        %v234 = vsel %vm209, %v222, 0
        %v237 = vsel %vm209, %v223, 0
        %v240 = vsel %vm209, %v224, 0
        %v243 = vsel %vm209, %v225, 0
        %v246 = vsel %vm209, %v226, 0
        %v249 = vsel %vm209, %v227, 0
        %v252 = vsel %vm209, %v228, 0
        %v255 = vsel %vm209, %v229, 0
        %257 = vmatprep.subr.mxu0 0.0
        %258 = vmatpush1.xpose.msra.mxu0 %v234
        %259 = vmatprep.subr.mxu0 0.0
        %260 = vmatpush1.xpose.msra.mxu0 %v237
        %261 = vmatprep.subr.mxu0 0.0
        %262 = vmatpush1.xpose.msra.mxu0 %v240
        %263 = vmatprep.subr.mxu0 0.0
        %264 = vmatpush1.xpose.msra.mxu0 %v243
        %265 = vmatprep.subr.mxu0 0.0
        %266 = vmatpush1.xpose.msra.mxu0 %v246
        %267 = vmatprep.subr.mxu0 0.0
        %268 = vmatpush1.xpose.msra.mxu0 %v249
        %269 = vmatprep.subr.mxu0 0.0
        %270 = vmatpush1.xpose.msra.mxu0 %v252
        %271 = vmatprep.subr.mxu0 0.0
        %272 = vmatpush1.xpose.msra.mxu0 %v255
        %273 = vmatprep.subr.mxu0 0.0
        %274 = vmatpush1.xpose.msra.mxu0 0.0
        %275 = vmatprep.subr.mxu0 0.0
        %276 = vmatpush1.xpose.msra.mxu0 0.0
        %277 = vmatprep.subr.mxu0 0.0
        %278 = vmatpush1.xpose.msra.mxu0 0.0
        %279 = vmatprep.subr.mxu0 0.0
        %280 = vmatpush1.xpose.msra.mxu0 0.0
        %281 = vmatprep.subr.mxu0 0.0
        %282 = vmatpush1.xpose.msra.mxu0 0.0
        %283 = vmatprep.subr.mxu0 0.0
        %284 = vmatpush1.xpose.msra.mxu0 0.0
        %285 = vmatprep.subr.mxu0 0.0
        %286 = vmatpush1.xpose.msra.mxu0 0.0
        %287 = vmatprep.subr.mxu0 0.0
        %288 = vmatpush1.xpose.msra.mxu0 0.0
        %289 = vmatprep.subr.mxu0 0.0
        %290 = vmatpush1.xpose.msra.mxu0 0.0
        %291 = vmatprep.subr.mxu0 0.0
        %292 = vmatpush1.xpose.msra.mxu0 0.0
        %293 = vmatprep.subr.mxu0 0.0
        %294 = vmatpush1.xpose.msra.mxu0 0.0
        %295 = vmatprep.subr.mxu0 0.0
        %296 = vmatpush1.xpose.msra.mxu0 0.0
        %297 = vmatprep.subr.mxu0 0.0
        %298 = vmatpush1.xpose.msra.mxu0 0.0
        %299 = vmatprep.subr.mxu0 0.0
        %300 = vmatpush1.xpose.msra.mxu0 0.0
        %301 = vmatprep.subr.mxu0 0.0
        %302 = vmatpush1.xpose.msra.mxu0 0.0
        %303 = vmatprep.subr.mxu0 0.0
        %304 = vmatpush1.xpose.msra.mxu0 0.0
        %305 = vmatprep.subr.mxu0 0.0
        %306 = vmatpush1.xpose.msra.mxu0 0.0
        %307 = vmatprep.subr.mxu0 0.0
        %308 = vmatpush1.xpose.msra.mxu0 0.0
        %309 = vmatprep.subr.mxu0 0.0
        %310 = vmatpush1.xpose.msra.mxu0 0.0
        %311 = vmatprep.subr.mxu0 0.0
        %312 = vmatpush1.xpose.msra.mxu0 0.0
        %313 = vmatprep.subr.mxu0 0.0
        %314 = vmatpush1.xpose.msra.mxu0 0.0
        %315 = vmatprep.subr.mxu0 0.0
        %316 = vmatpush1.xpose.msra.mxu0 0.0
        %317 = vmatprep.subr.mxu0 0.0
        %318 = vmatpush1.xpose.msra.mxu0 0.0
        %319 = vmatprep.subr.mxu0 0.0
        %320 = vmatpush1.xpose.msra.mxu0 0.0
        %321 = vmatprep.mubr.f32.mxu0 0.0
        %322 = vmatmul.mubr.f32.gmra.mrb[0].mxu0 %v231
        %v323 = vpop.f32.mrb[0].mxu0
        %v324 = vadd.f32 0.0, %v323
        %v325 = vpop.f32.mrb[0].mxu0
        %326 = vdwg.mxu0
        %v328 = vsel %vm209, %v193, 0
        %v331 = vsel %vm209, %v194, 0
        %v334 = vsel %vm209, %v195, 0
        %v337 = vsel %vm209, %v196, 0
        %v340 = vsel %vm209, %v197, 0
        %v343 = vsel %vm209, %v198, 0
        %v346 = vsel %vm209, %v199, 0
        %v349 = vsel %vm209, %v200, 0
        %v352 = vsel %vm209, %v201, 0
        %v355 = vsel %vm209, %v202, 0
        %v358 = vsel %vm209, %v203, 0
        %v361 = vsel %vm209, %v204, 0
        %363 = vmatprep.subr.mxu0 0.0
        %364 = vmatpush1.xpose.msra.mxu0 %v340
        %365 = vmatprep.subr.mxu0 0.0
        %366 = vmatpush1.xpose.msra.mxu0 %v343
        %367 = vmatprep.subr.mxu0 0.0
        %368 = vmatpush1.xpose.msra.mxu0 %v346
        %369 = vmatprep.subr.mxu0 0.0
        %370 = vmatpush1.xpose.msra.mxu0 %v349
        %371 = vmatprep.subr.mxu0 0.0
        %372 = vmatpush1.xpose.msra.mxu0 %v352
        %373 = vmatprep.subr.mxu0 0.0
        %374 = vmatpush1.xpose.msra.mxu0 %v355
        %375 = vmatprep.subr.mxu0 0.0
        %376 = vmatpush1.xpose.msra.mxu0 %v358
        %377 = vmatprep.subr.mxu0 0.0
        %378 = vmatpush1.xpose.msra.mxu0 %v361
        %379 = vmatprep.subr.mxu0 0.0
        %380 = vmatpush1.xpose.msra.mxu0 0.0
        %381 = vmatprep.subr.mxu0 0.0
        %382 = vmatpush1.xpose.msra.mxu0 0.0
        %383 = vmatprep.subr.mxu0 0.0
        %384 = vmatpush1.xpose.msra.mxu0 0.0
        %385 = vmatprep.subr.mxu0 0.0
        %386 = vmatpush1.xpose.msra.mxu0 0.0
        %387 = vmatprep.subr.mxu0 0.0
        %388 = vmatpush1.xpose.msra.mxu0 0.0
        %389 = vmatprep.subr.mxu0 0.0
        %390 = vmatpush1.xpose.msra.mxu0 0.0
        %391 = vmatprep.subr.mxu0 0.0
        %392 = vmatpush1.xpose.msra.mxu0 0.0
        %393 = vmatprep.subr.mxu0 0.0
        %394 = vmatpush1.xpose.msra.mxu0 0.0
        %395 = vmatprep.subr.mxu0 0.0
        %396 = vmatpush1.xpose.msra.mxu0 0.0
        %397 = vmatprep.subr.mxu0 0.0
        %398 = vmatpush1.xpose.msra.mxu0 0.0
        %399 = vmatprep.subr.mxu0 0.0
        %400 = vmatpush1.xpose.msra.mxu0 0.0
        %401 = vmatprep.subr.mxu0 0.0
        %402 = vmatpush1.xpose.msra.mxu0 0.0
        %403 = vmatprep.subr.mxu0 0.0
        %404 = vmatpush1.xpose.msra.mxu0 0.0
        %405 = vmatprep.subr.mxu0 0.0
        %406 = vmatpush1.xpose.msra.mxu0 0.0
        %407 = vmatprep.subr.mxu0 0.0
        %408 = vmatpush1.xpose.msra.mxu0 0.0
        %409 = vmatprep.subr.mxu0 0.0
        %410 = vmatpush1.xpose.msra.mxu0 0.0
        %411 = vmatprep.subr.mxu0 0.0
        %412 = vmatpush1.xpose.msra.mxu0 0.0
        %413 = vmatprep.subr.mxu0 0.0
        %414 = vmatpush1.xpose.msra.mxu0 0.0
        %415 = vmatprep.subr.mxu0 0.0
        %416 = vmatpush1.xpose.msra.mxu0 0.0
        %417 = vmatprep.subr.mxu0 0.0
        %418 = vmatpush1.xpose.msra.mxu0 0.0
        %419 = vmatprep.subr.mxu0 0.0
        %420 = vmatpush1.xpose.msra.mxu0 0.0
        %421 = vmatprep.subr.mxu0 0.0
        %422 = vmatpush1.xpose.msra.mxu0 0.0
        %423 = vmatprep.subr.mxu0 0.0
        %424 = vmatpush1.xpose.msra.mxu0 0.0
        %425 = vmatprep.subr.mxu0 0.0
        %426 = vmatpush1.xpose.msra.mxu0 0.0
        %427 = vmatprep.mubr.f32.mxu0 0.0
        %428 = vmatmul.mubr.f32.gmra.mrb[0].mxu0 %v328
        %v429 = vpop.f32.mrb[0].mxu0
        %v430 = vadd.f32 0.0, %v429
        %v431 = vpop.f32.mrb[0].mxu0
        %432 = vmatprep.mubr.f32.mxu0 0.0
        %433 = vmatmul.mubr.f32.gmra.mrb[0].mxu0 %v331
        %v434 = vpop.f32.mrb[0].mxu0
        %v435 = vadd.f32 0.0, %v434
        %v436 = vpop.f32.mrb[0].mxu0
        %437 = vmatprep.mubr.f32.mxu0 0.0
        %438 = vmatmul.mubr.f32.gmra.mrb[0].mxu0 %v334
        %v439 = vpop.f32.mrb[0].mxu0
        %v440 = vadd.f32 0.0, %v439
        %v441 = vpop.f32.mrb[0].mxu0
        %442 = vmatprep.mubr.f32.mxu0 0.0
        %443 = vmatmul.mubr.f32.gmra.mrb[0].mxu0 %v337
        %v444 = vpop.f32.mrb[0].mxu0
        %v445 = vadd.f32 0.0, %v444
        %v446 = vpop.f32.mrb[0].mxu0
        %447 = vdwg.mxu0
        %v448 = vlaneseq
        %v449 = vshrl.u32 %v448, 7
        %v450 = vsub.s32 0, %v449
        %v451 = vrot.slane %v324, %v450
        %v452 = vadd.f32 %v212, %v451
        %v453 = vadd.f32 %v215, %v451
        %v454 = vadd.f32 %v218, %v451
        %v455 = vadd.f32 %v221, %v451
        %v456 = vmul.f32 %v430, 2.0
        %v457 = vmul.f32 %v435, 2.0
        %v458 = vmul.f32 %v440, 2.0
        %v459 = vmul.f32 %v445, 2.0
        %v460 = vsub.f32 %v452, %v456
        %v461 = vsub.f32 %v453, %v457
        %v462 = vsub.f32 %v454, %v458
        %v463 = vsub.f32 %v455, %v459
        %vm464 = vcmask 523264
        %465 = vst.msk [vmem:[%s176] sm:$0xff] %vm464, %v460
        %466 = vst.msk [vmem:[%s176 + $0x8] sm:$0xff] %vm464, %v461
        %467 = vst.msk [vmem:[%s176 + $0x10] sm:$0xff] %vm464, %v462
        %468 = vst.msk [vmem:[%s176 + $0x18] sm:$0xff] %vm464, %v463
        %s469 = sand.u32 %s92, 1
        %s470 = scalar_lea.sflag [#allocation3], %s469
        %s471 = sand.u32 %s92, 1
        %s472 = smul.addr %s471, 32
        %s473 = scalar_lea.vmem [#allocation2], %s472
        // Predicated region
        $region29: #{tpu_custom_call.1} parent=27 // pred_check
          %p474 = pneg %p102
        $region30: #{tpu_custom_call.1} parent=27 // pred_check_branch
          %476 = sbr.rel (%p474) target = $region32
        $region31: #{tpu_custom_call.1} parent=27 // pred_region
          %s477 = smul.u32 4, %s21
          %s479 = ssub.s32 512, 512
          %480 = vsyncadd %s470, %s479
          %s481 = smul.addr %s20, 4
          %s482 = sadd.s32 %s477, %s481
          %s483 = smul.addr %s482, 128
          %s484 = scalar_lea.hbm %s2, %s483
          %s485 = sshll.u32 %s473, 4
          %s486 = int_to_ptr.vmem [resolvable:$true] %s485
          %491 = dma.vmem_to_hbm [thread:$0]  %s486, 512, %s484, %s470, 128, 128, 8
        $region32: #{tpu_custom_call.1} parent=27 // pred_fallthru
          _
      $region28: #{tpu_custom_call.1} parent=5 // pred_fallthru
        _
      %p492 = scmp.le.s32.totalorder 2, %s11
      // Predicated region
      $region33: #{tpu_custom_call.1} parent=5 // pred_check
        %p493 = pneg %p492
      $region34: #{tpu_custom_call.1} parent=5 // pred_check_branch
        %495 = sbr.rel (%p493) target = $region36
      $region35: #{tpu_custom_call.1} parent=5 // pred_region
        %s496 = ssub.s32 %s11, 2
        // Predicated region
        $region37: #{tpu_custom_call.1} parent=35 // pred_check
          %p497 = pneg %p108
        $region38: #{tpu_custom_call.1} parent=35 // pred_check_branch
          %499 = sbr.rel (%p497) target = $region40
        $region39: #{tpu_custom_call.1} parent=35 // pred_region
          %s500 = sand.u32 %s93, 1
          %s501 = scalar_lea.sflag [#allocation3], %s500
          %s502 = sand.u32 %s93, 1
          %s503 = smul.addr %s502, 32
          %s504 = scalar_lea.vmem [#allocation2], %s503
          %505 = dma.done %s501, 512
        $region40: #{tpu_custom_call.1} parent=35 // pred_fallthru
          _
      $region36: #{tpu_custom_call.1} parent=5 // pred_fallthru
        _
    $region6: #{tpu_custom_call.1} parent=1 // loop_footer
      %s15 = sadd.s32 1, %s11
    $region7: #{tpu_custom_call.1} parent=1 // loop_footer_branch
      %10 = sbr.rel target = $region3
    $region8: #{tpu_custom_call.1} parent=1 // loop_exit
      _
    %506 = vsyncpa [#allocation3], 1
    %s507 = scalar_lea.sflag [#allocation3], 1
    %508 = vsyncpa %s507, 1

</llo_original>
